<compile_context>
chip_gen: v7x
topology: tpu7x:2x2x1
jax: 0.10.0
libtpu: 0.0.40
codegen_flags: <defaults>
</compile_context>

<pallas_src>
import functools

import jax
import jax.numpy as jnp
from jax.experimental import pallas as pl
from jax.experimental.pallas import tpu as pltpu  # noqa: F401  (TPU memory spaces / params if scaled up)

# ----------------------------- problem sizes ------------------------------
N_NODES   = 32    # number of graph nodes
N_FEATS   = 16    # input feature dim  (features.shape[1])
N_HIDDEN  = 32    # ndim
N_TARGETS = 8     # ntargets
N_EDGES   = 64
DROPRATE  = 0.5   # module default
LANE      = 128   # TPU lane width


# ------------------------- plain-JAX glue (setup) --------------------------
def gcn_norm_dense(edge_index, edge_weight, num_nodes):
    """Dense torch_geometric gcn_norm (add self loops + symmetric norm).

    Returns Ahat with Ahat[dst, src] = d_dst^-1/2 * w * d_src^-1/2, so that
    propagation is  out = Ahat @ x  (messages flow src -> dst)."""
    row = edge_index[0]
    col = edge_index[1]
    if edge_weight is None:
        w = jnp.ones(row.shape[0], dtype=jnp.float32)
    else:
        w = edge_weight.astype(jnp.float32)
    loop = jnp.arange(num_nodes, dtype=row.dtype)
    row = jnp.concatenate([row, loop])
    col = jnp.concatenate([col, loop])
    w = jnp.concatenate([w, jnp.ones(num_nodes, dtype=jnp.float32)])

    deg = jnp.zeros(num_nodes, dtype=jnp.float32).at[col].add(w)
    dinv = jnp.where(deg > 0, 1.0 / jnp.sqrt(deg), 0.0)
    norm = dinv[row] * w * dinv[col]
    a = jnp.zeros((num_nodes, num_nodes), dtype=jnp.float32)
    a = a.at[col, row].add(norm)
    return a


def _pad2(x, rows, cols):
    r, c = x.shape
    return jnp.pad(x, ((0, rows - r), (0, cols - c)))


def _round_up(v, m):
    return ((v + m - 1) // m) * m


# ------------------------------ Pallas kernel ------------------------------
def gcn_kernel(a1_ref, a2_ref, x_ref, m1_ref, m2_ref, w1_ref, b1_ref,
               w2_ref, b2_ref, out_ref, *, n_targets):
    a1 = a1_ref[...]                       # (N, N)  bf16
    a2 = a2_ref[...]                       # (N, N)  bf16

    # F.dropout(features, p, training=True) -- inverted-dropout keep mask
    # (0 or 1/(1-p)) precomputed on the host.
    x = x_ref[...] * m1_ref[...]           # (N, Fp) bf16

    # ---- GCNConv layer 1:  (A1 @ x) @ W1 + b1  (cheaper association:
    #      the tiny K=F contraction stays out of the larger matmul) ----
    ax = jnp.dot(a1, x, preferred_element_type=jnp.float32)
    h = jnp.dot(ax.astype(w1_ref.dtype), w1_ref[...],
                preferred_element_type=jnp.float32)
    h = h + b1_ref[...]

    # ReLU
    h = jnp.maximum(h, 0.0)

    # F.dropout(x, p)  (training=True by default in F.dropout)
    h = h * m2_ref[...]

    # ---- GCNConv layer 2:  A2 @ (h @ W2) + b2 ----
    hw = jnp.dot(h.astype(w2_ref.dtype), w2_ref[...],
                 preferred_element_type=jnp.float32)
    z = jnp.dot(a2, hw.astype(a2.dtype), preferred_element_type=jnp.float32)
    z = z + b2_ref[...]

    # log_softmax over dim=1, restricted to the first n_targets (real) lanes;
    # the remaining lanes are zero padding and must not enter the reduction.
    lane = jax.lax.broadcasted_iota(jnp.int32, z.shape, dimension=1)
    valid = lane < n_targets
    zm = jnp.where(valid, z, jnp.float32(-1e30))
    m = jnp.max(zm, axis=1, keepdims=True)
    e = jnp.where(valid, jnp.exp(zm - m), 0.0)
    lse = jnp.log(jnp.sum(e, axis=1, keepdims=True)) + m
    out_ref[...] = jnp.where(valid, z - lse, 0.0)


def gcn_forward(a1, a2, x, w1, b1, w2, b2, key, droprate=DROPRATE):
    n, f = x.shape
    hid = w1.shape[1]
    ntargets = w2.shape[1]
    fp, hp, tp = _round_up(f, LANE), _round_up(hid, LANE), _round_up(ntargets, LANE)

    # Lane-dense, MXU-friendly operands: zero-pad feature/class dims to 128
    # and cast matmul inputs to bf16 (f32 accumulation inside the kernel).
    x_p  = _pad2(x,  n,  fp).astype(jnp.bfloat16)
    w1_p = _pad2(w1, fp, hp).astype(jnp.bfloat16)
    w2_p = _pad2(w2, hp, tp).astype(jnp.bfloat16)
    b1_p = _pad2(b1, 1, hp).astype(jnp.float32)
    b2_p = _pad2(b2, 1, tp).astype(jnp.float32)
    a1_b = a1.astype(jnp.bfloat16)
    a2_b = a2.astype(jnp.bfloat16)

    # TODO(synk): PyTorch's dropout RNG stream cannot be reproduced bit-exactly;
    # masks are drawn with jax.random (same Bernoulli(1-p) / (1-p) semantics).
    k1, k2 = jax.random.split(key)
    keep = 1.0 - droprate
    m1 = (jax.random.bernoulli(k1, keep, (n, fp)).astype(jnp.float32)
          * (1.0 / keep)).astype(jnp.bfloat16)
    m2 = (jax.random.bernoulli(k2, keep, (n, hp)).astype(jnp.float32)
          * (1.0 / keep))

    def full(a):
        return pl.BlockSpec(a.shape, lambda: (0,) * a.ndim)

    out = pl.pallas_call(
        functools.partial(gcn_kernel, n_targets=ntargets),
        out_shape=jax.ShapeDtypeStruct((n, tp), jnp.float32),
        in_specs=[full(a1_b), full(a2_b), full(x_p), full(m1), full(m2),
                  full(w1_p), full(b1_p), full(w2_p), full(b2_p)],
        out_specs=pl.BlockSpec((n, tp), lambda: (0, 0)),
    )(a1_b, a2_b, x_p, m1, m2, w1_p, b1_p, w2_p, b2_p)

    # strip class-dim padding
    return out[:, :ntargets]


# ---------------------------------- main -----------------------------------
if __name__ == "__main__":
    key = jax.random.PRNGKey(0)
    (k_feat, k_src, k_dst, k_ew, k_w1, k_w2, k_drop) = jax.random.split(key, 7)

    # deterministic synthetic graph + features
    features = jax.random.normal(k_feat, (N_NODES, N_FEATS), dtype=jnp.float32)
    src = jax.random.randint(k_src, (N_EDGES,), 0, N_NODES, dtype=jnp.int32)
    dst = jax.random.randint(k_dst, (N_EDGES,), 0, N_NODES, dtype=jnp.int32)
    edges = jnp.stack([src, dst], axis=0)                      # (2, E)
    edge_weights = jax.random.uniform(k_ew, (N_EDGES,), jnp.float32, 0.1, 1.0)

    # deterministic GCNConv parameters (glorot-style scale, zero bias)
    w1 = jax.random.normal(k_w1, (N_FEATS, N_HIDDEN), jnp.float32) * (
        1.0 / jnp.sqrt(N_FEATS))
    b1 = jnp.zeros((1, N_HIDDEN), jnp.float32)
    w2 = jax.random.normal(k_w2, (N_HIDDEN, N_TARGETS), jnp.float32) * (
        1.0 / jnp.sqrt(N_HIDDEN))
    b2 = jnp.zeros((1, N_TARGETS), jnp.float32)

    # conv1 is called with edge_weight=None, conv2 with self.weights
    a_hat_1 = gcn_norm_dense(edges, None, N_NODES)
    a_hat_2 = gcn_norm_dense(edges, edge_weights, N_NODES)

    out = gcn_forward(a_hat_1, a_hat_2, features, w1, b1, w2, b2, k_drop)
    jax.block_until_ready(out)

    assert out.shape == (N_NODES, N_TARGETS)
    assert bool(jnp.all(jnp.isfinite(out)))
    # log_softmax rows must (approximately) sum to 1 in prob space
    assert bool(jnp.all(jnp.abs(jnp.sum(jnp.exp(out), axis=1) - 1.0) < 1e-3))
    print("KERNEL_OK")
</pallas_src>

<mosaic_0001>
module attributes {stable_mosaic.version = 11 : i64} {
  func.func @gcn_kernel(%arg0: memref<32x32xbf16, #tpu.memory_space<vmem>>, %arg1: memref<32x32xbf16, #tpu.memory_space<vmem>>, %arg2: memref<32x128xbf16, #tpu.memory_space<vmem>>, %arg3: memref<32x128xbf16, #tpu.memory_space<vmem>>, %arg4: memref<32x128xf32, #tpu.memory_space<vmem>>, %arg5: memref<128x128xbf16, #tpu.memory_space<vmem>>, %arg6: memref<1x128xf32, #tpu.memory_space<vmem>>, %arg7: memref<128x128xbf16, #tpu.memory_space<vmem>>, %arg8: memref<1x128xf32, #tpu.memory_space<vmem>>, %arg9: memref<32x128xf32, #tpu.memory_space<vmem>>) attributes {dimension_semantics = [], scalar_prefetch = 0 : i64, scratch_operands = 0 : i64, tpu.core_type = #tpu.core_type<tc>} {
    %c0 = arith.constant 0 : index
    %c0_0 = arith.constant 0 : index
    %0 = vector.load %arg0[%c0, %c0_0] : memref<32x32xbf16, #tpu.memory_space<vmem>>, vector<32x32xbf16>
    %c0_1 = arith.constant 0 : index
    %c0_2 = arith.constant 0 : index
    %1 = vector.load %arg1[%c0_1, %c0_2] : memref<32x32xbf16, #tpu.memory_space<vmem>>, vector<32x32xbf16>
    %c0_3 = arith.constant 0 : index
    %c0_4 = arith.constant 0 : index
    %2 = vector.load %arg2[%c0_3, %c0_4] : memref<32x128xbf16, #tpu.memory_space<vmem>>, vector<32x128xbf16>
    %c0_5 = arith.constant 0 : index
    %c0_6 = arith.constant 0 : index
    %3 = vector.load %arg3[%c0_5, %c0_6] : memref<32x128xbf16, #tpu.memory_space<vmem>>, vector<32x128xbf16>
    %4 = arith.mulf %2, %3 : vector<32x128xbf16>
    %cst = arith.constant dense<0.000000e+00> : vector<32x128xf32>
    %5 = tpu.matmul %0, %4, %cst {dimension_numbers = #tpu.dot_dimension_numbers<[1], [0], [0], [1], [0, 0, 1, 1], [], []>} : vector<32x32xbf16>, vector<32x128xbf16>, vector<32x128xf32> -> vector<32x128xf32>
    %6 = arith.truncf %5 : vector<32x128xf32> to vector<32x128xbf16>
    %c0_7 = arith.constant 0 : index
    %c0_8 = arith.constant 0 : index
    %7 = vector.load %arg5[%c0_7, %c0_8] : memref<128x128xbf16, #tpu.memory_space<vmem>>, vector<128x128xbf16>
    %cst_9 = arith.constant dense<0.000000e+00> : vector<32x128xf32>
    %8 = tpu.matmul %6, %7, %cst_9 {dimension_numbers = #tpu.dot_dimension_numbers<[1], [0], [0], [1], [0, 0, 1, 1], [], []>} : vector<32x128xbf16>, vector<128x128xbf16>, vector<32x128xf32> -> vector<32x128xf32>
    %c0_10 = arith.constant 0 : index
    %c0_11 = arith.constant 0 : index
    %9 = vector.load %arg6[%c0_10, %c0_11] : memref<1x128xf32, #tpu.memory_space<vmem>>, vector<1x128xf32>
    %10 = vector.broadcast %9 : vector<1x128xf32> to vector<32x128xf32>
    %11 = arith.addf %8, %10 : vector<32x128xf32>
    %cst_12 = arith.constant 0.000000e+00 : f32
    %12 = vector.broadcast %cst_12 : f32 to vector<32x128xf32>
    %13 = arith.maximumf %11, %12 : vector<32x128xf32>
    %c0_13 = arith.constant 0 : index
    %c0_14 = arith.constant 0 : index
    %14 = vector.load %arg4[%c0_13, %c0_14] : memref<32x128xf32, #tpu.memory_space<vmem>>, vector<32x128xf32>
    %15 = arith.mulf %13, %14 : vector<32x128xf32>
    %16 = arith.truncf %15 : vector<32x128xf32> to vector<32x128xbf16>
    %c0_15 = arith.constant 0 : index
    %c0_16 = arith.constant 0 : index
    %17 = vector.load %arg7[%c0_15, %c0_16] : memref<128x128xbf16, #tpu.memory_space<vmem>>, vector<128x128xbf16>
    %cst_17 = arith.constant dense<0.000000e+00> : vector<32x128xf32>
    %18 = tpu.matmul %16, %17, %cst_17 {dimension_numbers = #tpu.dot_dimension_numbers<[1], [0], [0], [1], [0, 0, 1, 1], [], []>} : vector<32x128xbf16>, vector<128x128xbf16>, vector<32x128xf32> -> vector<32x128xf32>
    %19 = arith.truncf %18 : vector<32x128xf32> to vector<32x128xbf16>
    %cst_18 = arith.constant dense<0.000000e+00> : vector<32x128xf32>
    %20 = tpu.matmul %1, %19, %cst_18 {dimension_numbers = #tpu.dot_dimension_numbers<[1], [0], [0], [1], [0, 0, 1, 1], [], []>} : vector<32x32xbf16>, vector<32x128xbf16>, vector<32x128xf32> -> vector<32x128xf32>
    %c0_19 = arith.constant 0 : index
    %c0_20 = arith.constant 0 : index
    %21 = vector.load %arg8[%c0_19, %c0_20] : memref<1x128xf32, #tpu.memory_space<vmem>>, vector<1x128xf32>
    %22 = vector.broadcast %21 : vector<1x128xf32> to vector<32x128xf32>
    %23 = arith.addf %20, %22 : vector<32x128xf32>
    %24 = tpu.iota {dimensions = array<i32: 1>} : vector<32x128xi32>
    %c8_i32 = arith.constant 8 : i32
    %25 = vector.broadcast %c8_i32 : i32 to vector<32x128xi32>
    %26 = arith.cmpi slt, %24, %25 : vector<32x128xi32>
    %cst_21 = arith.constant -1.000000e+30 : f32
    %27 = vector.broadcast %cst_21 : f32 to vector<32x128xf32>
    %28 = arith.select %26, %23, %27 : vector<32x128xi1>, vector<32x128xf32>
    %cst_22 = arith.constant dense<0xFF800000> : vector<32xf32>
    %29 = vector.multi_reduction <maximumf>, %28, %cst_22 [1] : vector<32x128xf32> to vector<32xf32>
    %30 = vector.shape_cast %29 : vector<32xf32> to vector<32x1xf32>
    %31 = vector.broadcast %30 : vector<32x1xf32> to vector<32x128xf32>
    %32 = arith.subf %28, %31 : vector<32x128xf32>
    %33 = math.exp %32 : vector<32x128xf32>
    %cst_23 = arith.constant 0.000000e+00 : f32
    %34 = vector.broadcast %cst_23 : f32 to vector<32x128xf32>
    %35 = arith.select %26, %33, %34 : vector<32x128xi1>, vector<32x128xf32>
    %cst_24 = arith.constant dense<0.000000e+00> : vector<32xf32>
    %36 = vector.multi_reduction <add>, %35, %cst_24 [1] : vector<32x128xf32> to vector<32xf32>
    %37 = vector.shape_cast %36 : vector<32xf32> to vector<32x1xf32>
    %38 = math.log %37 : vector<32x1xf32>
    %39 = arith.addf %38, %30 : vector<32x1xf32>
    %40 = vector.broadcast %39 : vector<32x1xf32> to vector<32x128xf32>
    %41 = arith.subf %23, %40 : vector<32x128xf32>
    %cst_25 = arith.constant 0.000000e+00 : f32
    %42 = vector.broadcast %cst_25 : f32 to vector<32x128xf32>
    %43 = arith.select %26, %41, %42 : vector<32x128xi1>, vector<32x128xf32>
    %c0_26 = arith.constant 0 : index
    %c0_27 = arith.constant 0 : index
    %44 = vector.load %arg9[%c0_26, %c0_27] : memref<32x128xf32, #tpu.memory_space<vmem>>, vector<32x128xf32>
    tpu.vector_store %arg9[%c0_26, %c0_27], %43 {strides = array<i32>} : memref<32x128xf32, #tpu.memory_space<vmem>>, vector<32x128xf32>,
    return
  }
}

</mosaic_0001>

<llo_original>
// kernel: tpu_custom_call.1
$region0: #{tpu_custom_call.1}
  #allocation0 [shape = 'u32[]', space=smem, size = 0x4, offset = 0x4, fixed_abs, tag = 'smem constant byte address 0x4 - core index']
  #allocation1 [shape = 'u32[144,128]{1,0:T(1,128)}', space=vmem, size = 0x12000, scoped, tag = 'internal scratch']
  %s0 = inlined_call_operand.hbm [shape: bf16[32,32], index: 0, kind: input, shape index: {}]
  %s1 = inlined_call_operand.hbm [shape: bf16[32,32], index: 1, kind: input, shape index: {}]
  %s2 = inlined_call_operand.hbm [shape: bf16[32,128], index: 2, kind: input, shape index: {}]
  %s3 = inlined_call_operand.hbm [shape: bf16[32,128], index: 3, kind: input, shape index: {}]
  %s4 = inlined_call_operand.hbm [shape: f32[32,128], index: 4, kind: input, shape index: {}]
  %s5 = inlined_call_operand.hbm [shape: bf16[128,128], index: 5, kind: input, shape index: {}]
  %s6 = inlined_call_operand.vmem [shape: f32[1,128], index: 6, kind: input, shape index: {}]
  %s7 = inlined_call_operand.hbm [shape: bf16[128,128], index: 7, kind: input, shape index: {}]
  %s8 = inlined_call_operand.vmem [shape: f32[1,128], index: 8, kind: input, shape index: {}]
  %s9 = inlined_call_operand.hbm [shape: f32[32,128], index: 9, kind: output, shape index: {}]
  %s10 = sld [smem:[#allocation0]]
  $region74: #{tpu_custom_call.1} parent=0
    _
  %s12 = ssub.s32 1, %s10
  %s13 = scalar_select 0, %s12, %s10
  $region1: #{tpu_custom_call.1} parent=0
    #allocation2 [shape = 'u8[8192]{0}', space=vmem, size = 0x2000, scoped, tag = 'input window, operand 0, single buffered']
    #allocation3 [shape = 's32[1]{0}', space=sflag, size = 0x4, scoped, tag = 'scoped memory for tpu_custom_call.1']
    #allocation4 [shape = 's32[1]{0}', space=sflag, size = 0x4, scoped, tag = 'scoped memory for tpu_custom_call.1']
    #allocation5 [shape = 'u8[8192]{0}', space=vmem, size = 0x2000, scoped, tag = 'input window, operand 1, single buffered']
    #allocation6 [shape = 's32[1]{0}', space=sflag, size = 0x4, scoped, tag = 'scoped memory for tpu_custom_call.1']
    #allocation7 [shape = 'u8[8192]{0}', space=vmem, size = 0x2000, scoped, tag = 'input window, operand 2, single buffered']
    #allocation8 [shape = 'u8[8192]{0}', space=vmem, size = 0x2000, scoped, tag = 'input window, operand 3, single buffered']
    #allocation9 [shape = 's32[1]{0}', space=sflag, size = 0x4, scoped, tag = 'scoped memory for tpu_custom_call.1']
    #allocation10 [shape = 'u8[16384]{0}', space=vmem, size = 0x4000, scoped, tag = 'input window, operand 4, single buffered']
    #allocation11 [shape = 'u8[32768]{0}', space=vmem, size = 0x8000, scoped, tag = 'input window, operand 5, single buffered']
    #allocation12 [shape = 's32[1]{0}', space=sflag, size = 0x4, scoped, tag = 'scoped memory for tpu_custom_call.1']
    #allocation13 [shape = 'u8[32768]{0}', space=vmem, size = 0x8000, scoped, tag = 'input window, operand 7, single buffered']
    #allocation14 [shape = 'u8[16384]{0}', space=vmem, size = 0x4000, scoped, tag = 'output window, operand 0, single buffered']
    %14 = vsyncpa [#allocation3], 0
    %15 = vsyncpa [#allocation6], 0
    %16 = vsyncpa [#allocation9], 0
    %17 = vsyncpa [#allocation12], 0
    %18 = vsyncpa [#allocation4], 0
    // Predicated region
    $region2: #{tpu_custom_call.1} parent=1 // pred_check
      _
    $region3: #{tpu_custom_call.1} parent=1 // pred_check_branch
      %20 = sbr.rel (0) target = $region5
    $region4: #{tpu_custom_call.1} parent=1 // pred_region
      %s22 = ssub.s32 256, 256
      %23 = vsyncadd [#allocation3], %s22
      %s24 = sshll.u32 [#allocation2], 4
      %s25 = int_to_ptr.vmem [resolvable:$true] %s24
      %30 = dma.hbm_to_vmem [thread:$0]  %s0, 256, %s25, [#allocation3], 64, 64, 4
    $region5: #{tpu_custom_call.1} parent=1 // pred_fallthru
      _
    // Predicated region
    $region6: #{tpu_custom_call.1} parent=1 // pred_check
      _
    $region7: #{tpu_custom_call.1} parent=1 // pred_check_branch
      %32 = sbr.rel (0) target = $region9
    $region8: #{tpu_custom_call.1} parent=1 // pred_region
      %s34 = ssub.s32 256, 256
      %35 = vsyncadd [#allocation6], %s34
      %s36 = sshll.u32 [#allocation5], 4
      %s37 = int_to_ptr.vmem [resolvable:$true] %s36
      %42 = dma.hbm_to_vmem [thread:$0]  %s1, 256, %s37, [#allocation6], 64, 64, 4
    $region9: #{tpu_custom_call.1} parent=1 // pred_fallthru
      _
    // Predicated region
    $region10: #{tpu_custom_call.1} parent=1 // pred_check
      _
    $region11: #{tpu_custom_call.1} parent=1 // pred_check_branch
      %44 = sbr.rel (0) target = $region13
    $region12: #{tpu_custom_call.1} parent=1 // pred_region
      %s46 = ssub.s32 256, 256
      %47 = vsyncadd [#allocation6], %s46
      %s48 = sshll.u32 [#allocation7], 4
      %s49 = int_to_ptr.vmem [resolvable:$true] %s48
      %54 = dma.hbm_to_vmem [thread:$0]  %s2, 256, %s49, [#allocation6], 64, 64, 4
    $region13: #{tpu_custom_call.1} parent=1 // pred_fallthru
      _
    // Predicated region
    $region14: #{tpu_custom_call.1} parent=1 // pred_check
      _
    $region15: #{tpu_custom_call.1} parent=1 // pred_check_branch
      %56 = sbr.rel (0) target = $region17
    $region16: #{tpu_custom_call.1} parent=1 // pred_region
      %s58 = ssub.s32 256, 256
      %59 = vsyncadd [#allocation9], %s58
      %s60 = sshll.u32 [#allocation8], 4
      %s61 = int_to_ptr.vmem [resolvable:$true] %s60
      %66 = dma.hbm_to_vmem [thread:$0]  %s3, 256, %s61, [#allocation9], 64, 64, 4
    $region17: #{tpu_custom_call.1} parent=1 // pred_fallthru
      _
    // Predicated region
    $region18: #{tpu_custom_call.1} parent=1 // pred_check
      _
    $region19: #{tpu_custom_call.1} parent=1 // pred_check_branch
      %68 = sbr.rel (0) target = $region21
    $region20: #{tpu_custom_call.1} parent=1 // pred_region
      %s70 = ssub.s32 512, 512
      %71 = vsyncadd [#allocation9], %s70
      %s72 = sshll.u32 [#allocation10], 4
      %s73 = int_to_ptr.vmem [resolvable:$true] %s72
      %78 = dma.hbm_to_vmem [thread:$0]  %s4, 512, %s73, [#allocation9], 128, 128, 8
    $region21: #{tpu_custom_call.1} parent=1 // pred_fallthru
      _
    // Predicated region
    $region22: #{tpu_custom_call.1} parent=1 // pred_check
      _
    $region23: #{tpu_custom_call.1} parent=1 // pred_check_branch
      %80 = sbr.rel (0) target = $region25
    $region24: #{tpu_custom_call.1} parent=1 // pred_region
      %s82 = ssub.s32 1024, 1024
      %83 = vsyncadd [#allocation12], %s82
      %s84 = sshll.u32 [#allocation11], 4
      %s85 = int_to_ptr.vmem [resolvable:$true] %s84
      %90 = dma.hbm_to_vmem [thread:$0]  %s5, 1024, %s85, [#allocation12], 64, 64, 4
    $region25: #{tpu_custom_call.1} parent=1 // pred_fallthru
      _
    // Predicated region
    $region26: #{tpu_custom_call.1} parent=1 // pred_check
      _
    $region27: #{tpu_custom_call.1} parent=1 // pred_check_branch
      %92 = sbr.rel (0) target = $region29
    $region28: #{tpu_custom_call.1} parent=1 // pred_region
      _
    $region29: #{tpu_custom_call.1} parent=1 // pred_fallthru
      _
    // Predicated region
    $region30: #{tpu_custom_call.1} parent=1 // pred_check
      _
    $region31: #{tpu_custom_call.1} parent=1 // pred_check_branch
      %94 = sbr.rel (0) target = $region33
    $region32: #{tpu_custom_call.1} parent=1 // pred_region
      %s96 = ssub.s32 1024, 1024
      %97 = vsyncadd [#allocation12], %s96
      %s98 = sshll.u32 [#allocation13], 4
      %s99 = int_to_ptr.vmem [resolvable:$true] %s98
      %104 = dma.hbm_to_vmem [thread:$0]  %s7, 1024, %s99, [#allocation12], 64, 64, 4
    $region33: #{tpu_custom_call.1} parent=1 // pred_fallthru
      _
    // Predicated region
    $region34: #{tpu_custom_call.1} parent=1 // pred_check
      _
    $region35: #{tpu_custom_call.1} parent=1 // pred_check_branch
      %106 = sbr.rel (0) target = $region37
    $region36: #{tpu_custom_call.1} parent=1 // pred_region
      _
    $region37: #{tpu_custom_call.1} parent=1 // pred_fallthru
      _
    // Predicated region
    $region38: #{tpu_custom_call.1} parent=1 // pred_check
      _
    $region39: #{tpu_custom_call.1} parent=1 // pred_check_branch
      %108 = sbr.rel (0) target = $region41
    $region40: #{tpu_custom_call.1} parent=1 // pred_region
      %109 = dma.done [#allocation3], 256
    $region41: #{tpu_custom_call.1} parent=1 // pred_fallthru
      _
    // Predicated region
    $region42: #{tpu_custom_call.1} parent=1 // pred_check
      _
    $region43: #{tpu_custom_call.1} parent=1 // pred_check_branch
      %111 = sbr.rel (0) target = $region45
    $region44: #{tpu_custom_call.1} parent=1 // pred_region
      %112 = dma.done [#allocation6], 256
    $region45: #{tpu_custom_call.1} parent=1 // pred_fallthru
      _
    // Predicated region
    $region46: #{tpu_custom_call.1} parent=1 // pred_check
      _
    $region47: #{tpu_custom_call.1} parent=1 // pred_check_branch
      %114 = sbr.rel (0) target = $region49
    $region48: #{tpu_custom_call.1} parent=1 // pred_region
      %115 = dma.done [#allocation6], 256
    $region49: #{tpu_custom_call.1} parent=1 // pred_fallthru
      _
    // Predicated region
    $region50: #{tpu_custom_call.1} parent=1 // pred_check
      _
    $region51: #{tpu_custom_call.1} parent=1 // pred_check_branch
      %117 = sbr.rel (0) target = $region53
    $region52: #{tpu_custom_call.1} parent=1 // pred_region
      %118 = dma.done [#allocation9], 256
    $region53: #{tpu_custom_call.1} parent=1 // pred_fallthru
      _
    // Predicated region
    $region54: #{tpu_custom_call.1} parent=1 // pred_check
      _
    $region55: #{tpu_custom_call.1} parent=1 // pred_check_branch
      %120 = sbr.rel (0) target = $region57
    $region56: #{tpu_custom_call.1} parent=1 // pred_region
      %121 = dma.done [#allocation9], 512
    $region57: #{tpu_custom_call.1} parent=1 // pred_fallthru
      _
    // Predicated region
    $region58: #{tpu_custom_call.1} parent=1 // pred_check
      _
    $region59: #{tpu_custom_call.1} parent=1 // pred_check_branch
      %123 = sbr.rel (0) target = $region61
    $region60: #{tpu_custom_call.1} parent=1 // pred_region
      %124 = dma.done [#allocation12], 1024
    $region61: #{tpu_custom_call.1} parent=1 // pred_fallthru
      _
    // Predicated region
    $region62: #{tpu_custom_call.1} parent=1 // pred_check
      _
    $region63: #{tpu_custom_call.1} parent=1 // pred_check_branch
      %126 = sbr.rel (0) target = $region65
    $region64: #{tpu_custom_call.1} parent=1 // pred_region
      %127 = dma.done [#allocation12], 1024
    $region65: #{tpu_custom_call.1} parent=1 // pred_fallthru
      _
    %v129 = vld [vmem:[#allocation2] sm:$0xf]
    %v130 = vld [vmem:[#allocation2 + $0x4] sm:$0xf]
    %v131 = vld [vmem:[#allocation2 + $0x8] sm:$0xf]
    %v132 = vld [vmem:[#allocation2 + $0xc] sm:$0xf]
    %v133 = vld [vmem:[#allocation5] sm:$0xf]
    %v134 = vld [vmem:[#allocation5 + $0x4] sm:$0xf]
    %v135 = vld [vmem:[#allocation5 + $0x8] sm:$0xf]
    %v136 = vld [vmem:[#allocation5 + $0xc] sm:$0xf]
    %v137 = vld [vmem:[#allocation7] sm:$0xf]
    %v138 = vld [vmem:[#allocation7 + $0x4] sm:$0xf]
    %v139 = vld [vmem:[#allocation7 + $0x8] sm:$0xf]
    %v140 = vld [vmem:[#allocation7 + $0xc] sm:$0xf]
    %v141 = vld [vmem:[#allocation8] sm:$0xf]
    %v142 = vld [vmem:[#allocation8 + $0x4] sm:$0xf]
    %v143 = vld [vmem:[#allocation8 + $0x8] sm:$0xf]
    %v144 = vld [vmem:[#allocation8 + $0xc] sm:$0xf]
    %v145 = vmul.bf16 %v137, %v141
    %v146 = vmul.bf16 %v138, %v142
    %v147 = vmul.bf16 %v139, %v143
    %v148 = vmul.bf16 %v140, %v144
    %v153 = vunpack.c.l.b16 %v129
    %v154 = vunpack.c.l.b16 %v130
    %v155 = vunpack.c.l.b16 %v131
    %v156 = vunpack.c.l.b16 %v132
    %v157 = vpack.c.b16 %v154, %v153
    %v158 = vpack.c.b16 %v156, %v155
    %v163 = vunpack.c.l.b16 %v145
    %v164 = vunpack.c.l.b16 %v146
    %v165 = vunpack.c.l.b16 %v147
    %v166 = vunpack.c.l.b16 %v148
    %v167 = vpack.c.b16 %v164, %v163
    %v168 = vpack.c.b16 %v166, %v165
    %vm171 = vcmask 261120
    %v173 = vsel %vm171, %v157, 0
    %v176 = vsel %vm171, %v158, 0
    %178 = vmatprep.subr.bf16.mxu0 0
    %179 = vmatpush1.bf16.msra.mxu0 %v167
    %180 = vmatprep.subr.bf16.mxu0 0
    %181 = vmatpush1.bf16.msra.mxu0 %v168
    %182 = vmatprep.subr.bf16.mxu0 0
    %183 = vmatpush1.bf16.msra.mxu0 0
    %184 = vmatprep.subr.bf16.mxu0 0
    %185 = vmatpush1.bf16.msra.mxu0 0
    %186 = vmatprep.subr.bf16.mxu0 0
    %187 = vmatpush1.bf16.msra.mxu0 0
    %188 = vmatprep.subr.bf16.mxu0 0
    %189 = vmatpush1.bf16.msra.mxu0 0
    %190 = vmatprep.subr.bf16.mxu0 0
    %191 = vmatpush1.bf16.msra.mxu0 0
    %192 = vmatprep.subr.bf16.mxu0 0
    %193 = vmatpush1.bf16.msra.mxu0 0
    %194 = vmatprep.subr.bf16.mxu0 0
    %195 = vmatpush1.bf16.msra.mxu0 0
    %196 = vmatprep.subr.bf16.mxu0 0
    %197 = vmatpush1.bf16.msra.mxu0 0
    %198 = vmatprep.subr.bf16.mxu0 0
    %199 = vmatpush1.bf16.msra.mxu0 0
    %200 = vmatprep.subr.bf16.mxu0 0
    %201 = vmatpush1.bf16.msra.mxu0 0
    %202 = vmatprep.subr.bf16.mxu0 0
    %203 = vmatpush1.bf16.msra.mxu0 0
    %204 = vmatprep.subr.bf16.mxu0 0
    %205 = vmatpush1.bf16.msra.mxu0 0
    %206 = vmatprep.subr.bf16.mxu0 0
    %207 = vmatpush1.bf16.msra.mxu0 0
    %208 = vmatprep.subr.bf16.mxu0 0
    %209 = vmatpush1.bf16.msra.mxu0 0
    %210 = vmatprep.mubr.bf16.mxu0 0
    %211 = vmatmul.mubr.bf16.gmra.mrb[0].mxu0 %v173
    %v212 = vpop.f32.mrb[0].mxu0
    %v213 = vadd.f32 0.0, %v212
    %v214 = vpop.f32.mrb[0].mxu0
    %v215 = vpop.f32.mrb[0].mxu0
    %v216 = vadd.f32 0.0, %v215
    %v217 = vpop.f32.mrb[0].mxu0
    %218 = vmatprep.mubr.bf16.mxu0 0
    %219 = vmatmul.mubr.bf16.gmra.mrb[0].mxu0 %v176
    %v220 = vpop.f32.mrb[0].mxu0
    %v221 = vadd.f32 0.0, %v220
    %v222 = vpop.f32.mrb[0].mxu0
    %v223 = vpop.f32.mrb[0].mxu0
    %v224 = vadd.f32 0.0, %v223
    %v225 = vpop.f32.mrb[0].mxu0
    %226 = vdwg.mxu0
    %v227 = vpack.c.bf16 %v216, %v213
    %v228 = vpack.c.bf16 %v224, %v221
    %v229 = vld [vmem:[#allocation11] sm:$0xf]
    %v230 = vld [vmem:[#allocation11 + $0x4] sm:$0xf]
    %v231 = vld [vmem:[#allocation11 + $0x8] sm:$0xf]
    %v232 = vld [vmem:[#allocation11 + $0xc] sm:$0xf]
    %v233 = vld [vmem:[#allocation11 + $0x10] sm:$0xf]
    %v234 = vld [vmem:[#allocation11 + $0x14] sm:$0xf]
    %v235 = vld [vmem:[#allocation11 + $0x18] sm:$0xf]
    %v236 = vld [vmem:[#allocation11 + $0x1c] sm:$0xf]
    %v237 = vld [vmem:[#allocation11 + $0x20] sm:$0xf]
    %v238 = vld [vmem:[#allocation11 + $0x24] sm:$0xf]
    %v239 = vld [vmem:[#allocation11 + $0x28] sm:$0xf]
    %v240 = vld [vmem:[#allocation11 + $0x2c] sm:$0xf]
    %v241 = vld [vmem:[#allocation11 + $0x30] sm:$0xf]
    %v242 = vld [vmem:[#allocation11 + $0x34] sm:$0xf]
    %v243 = vld [vmem:[#allocation11 + $0x38] sm:$0xf]
    %v244 = vld [vmem:[#allocation11 + $0x3c] sm:$0xf]
    %v245 = vld [vmem:[%s6] sm:$0x1]
    %v247 = vlaneseq
    %v248 = vshrl.u32 %v247, 7
    %v249 = vsub.s32 0, %v248
    %v250 = vrot.slane %v245, %v249
    %v268 = vunpack.c.l.b16 %v229
    %v269 = vunpack.c.l.b16 %v230
    %v270 = vunpack.c.l.b16 %v231
    %v271 = vunpack.c.l.b16 %v232
    %v272 = vunpack.c.l.b16 %v233
    %v273 = vunpack.c.l.b16 %v234
    %v274 = vunpack.c.l.b16 %v235
    %v275 = vunpack.c.l.b16 %v236
    %v276 = vunpack.c.l.b16 %v237
    %v277 = vunpack.c.l.b16 %v238
    %v278 = vunpack.c.l.b16 %v239
    %v279 = vunpack.c.l.b16 %v240
    %v280 = vunpack.c.l.b16 %v241
    %v281 = vunpack.c.l.b16 %v242
    %v282 = vunpack.c.l.b16 %v243
    %v283 = vunpack.c.l.b16 %v244
    %v284 = vpack.c.b16 %v269, %v268
    %v285 = vpack.c.b16 %v271, %v270
    %v286 = vpack.c.b16 %v273, %v272
    %v287 = vpack.c.b16 %v275, %v274
    %v288 = vpack.c.b16 %v277, %v276
    %v289 = vpack.c.b16 %v279, %v278
    %v290 = vpack.c.b16 %v281, %v280
    %v291 = vpack.c.b16 %v283, %v282
    %300 = vmatprep.subr.bf16.mxu0 0
    %301 = vmatpush1.bf16.msra.mxu0 %v284
    %302 = vmatprep.subr.bf16.mxu0 0
    %303 = vmatpush1.bf16.msra.mxu0 %v285
    %304 = vmatprep.subr.bf16.mxu0 0
    %305 = vmatpush1.bf16.msra.mxu0 %v286
    %306 = vmatprep.subr.bf16.mxu0 0
    %307 = vmatpush1.bf16.msra.mxu0 %v287
    %308 = vmatprep.subr.bf16.mxu0 0
    %309 = vmatpush1.bf16.msra.mxu0 %v288
    %310 = vmatprep.subr.bf16.mxu0 0
    %311 = vmatpush1.bf16.msra.mxu0 %v289
    %312 = vmatprep.subr.bf16.mxu0 0
    %313 = vmatpush1.bf16.msra.mxu0 %v290
    %314 = vmatprep.subr.bf16.mxu0 0
    %315 = vmatpush1.bf16.msra.mxu0 %v291
    %316 = vmatprep.subr.bf16.mxu0 0
    %317 = vmatpush1.bf16.msra.mxu0 0
    %318 = vmatprep.subr.bf16.mxu0 0
    %319 = vmatpush1.bf16.msra.mxu0 0
    %320 = vmatprep.subr.bf16.mxu0 0
    %321 = vmatpush1.bf16.msra.mxu0 0
    %322 = vmatprep.subr.bf16.mxu0 0
    %323 = vmatpush1.bf16.msra.mxu0 0
    %324 = vmatprep.subr.bf16.mxu0 0
    %325 = vmatpush1.bf16.msra.mxu0 0
    %326 = vmatprep.subr.bf16.mxu0 0
    %327 = vmatpush1.bf16.msra.mxu0 0
    %328 = vmatprep.subr.bf16.mxu0 0
    %329 = vmatpush1.bf16.msra.mxu0 0
    %330 = vmatprep.subr.bf16.mxu0 0
    %331 = vmatpush1.bf16.msra.mxu0 0
    %332 = vmatprep.mubr.bf16.mxu0 0
    %333 = vmatmul.mubr.bf16.gmra.mrb[0].mxu0 %v227
    %v334 = vpop.f32.mrb[0].mxu0
    %v335 = vadd.f32 %v250, %v334
    %v336 = vpop.f32.mrb[0].mxu0
    %v337 = vpop.f32.mrb[0].mxu0
    %v338 = vadd.f32 %v250, %v337
    %v339 = vpop.f32.mrb[0].mxu0
    %340 = vmatprep.mubr.bf16.mxu0 0
    %341 = vmatmul.mubr.bf16.gmra.mrb[0].mxu0 %v228
    %v342 = vpop.f32.mrb[0].mxu0
    %v343 = vadd.f32 %v250, %v342
    %v344 = vpop.f32.mrb[0].mxu0
    %v345 = vpop.f32.mrb[0].mxu0
    %v346 = vadd.f32 %v250, %v345
    %v347 = vpop.f32.mrb[0].mxu0
    %348 = vdwg.mxu0
    %v349 = vmax.f32 %v335, 0.0
    %v350 = vmax.f32 %v338, 0.0
    %v351 = vmax.f32 %v343, 0.0
    %v352 = vmax.f32 %v346, 0.0
    %v353 = vld [vmem:[#allocation10] sm:$0xff]
    %v354 = vld [vmem:[#allocation10 + $0x8] sm:$0xff]
    %v355 = vld [vmem:[#allocation10 + $0x10] sm:$0xff]
    %v356 = vld [vmem:[#allocation10 + $0x18] sm:$0xff]
    %v357 = vmul.f32 %v349, %v353
    %v358 = vmul.f32 %v350, %v354
    %v359 = vmul.f32 %v351, %v355
    %v360 = vmul.f32 %v352, %v356
    %v361 = vpack.c.bf16 %v358, %v357
    %v362 = vpack.c.bf16 %v360, %v359
    %v363 = vld [vmem:[#allocation13] sm:$0xf]
    %v364 = vld [vmem:[#allocation13 + $0x4] sm:$0xf]
    %v365 = vld [vmem:[#allocation13 + $0x8] sm:$0xf]
    %v366 = vld [vmem:[#allocation13 + $0xc] sm:$0xf]
    %v367 = vld [vmem:[#allocation13 + $0x10] sm:$0xf]
    %v368 = vld [vmem:[#allocation13 + $0x14] sm:$0xf]
    %v369 = vld [vmem:[#allocation13 + $0x18] sm:$0xf]
    %v370 = vld [vmem:[#allocation13 + $0x1c] sm:$0xf]
    %v371 = vld [vmem:[#allocation13 + $0x20] sm:$0xf]
    %v372 = vld [vmem:[#allocation13 + $0x24] sm:$0xf]
    %v373 = vld [vmem:[#allocation13 + $0x28] sm:$0xf]
    %v374 = vld [vmem:[#allocation13 + $0x2c] sm:$0xf]
    %v375 = vld [vmem:[#allocation13 + $0x30] sm:$0xf]
    %v376 = vld [vmem:[#allocation13 + $0x34] sm:$0xf]
    %v377 = vld [vmem:[#allocation13 + $0x38] sm:$0xf]
    %v378 = vld [vmem:[#allocation13 + $0x3c] sm:$0xf]
    %v395 = vunpack.c.l.b16 %v363
    %v396 = vunpack.c.l.b16 %v364
    %v397 = vunpack.c.l.b16 %v365
    %v398 = vunpack.c.l.b16 %v366
    %v399 = vunpack.c.l.b16 %v367
    %v400 = vunpack.c.l.b16 %v368
    %v401 = vunpack.c.l.b16 %v369
    %v402 = vunpack.c.l.b16 %v370
    %v403 = vunpack.c.l.b16 %v371
    %v404 = vunpack.c.l.b16 %v372
    %v405 = vunpack.c.l.b16 %v373
    %v406 = vunpack.c.l.b16 %v374
    %v407 = vunpack.c.l.b16 %v375
    %v408 = vunpack.c.l.b16 %v376
    %v409 = vunpack.c.l.b16 %v377
    %v410 = vunpack.c.l.b16 %v378
    %v411 = vpack.c.b16 %v396, %v395
    %v412 = vpack.c.b16 %v398, %v397
    %v413 = vpack.c.b16 %v400, %v399
    %v414 = vpack.c.b16 %v402, %v401
    %v415 = vpack.c.b16 %v404, %v403
    %v416 = vpack.c.b16 %v406, %v405
    %v417 = vpack.c.b16 %v408, %v407
    %v418 = vpack.c.b16 %v410, %v409
    %427 = vmatprep.subr.bf16.mxu0 0
    %428 = vmatpush1.bf16.msra.mxu0 %v411
    %429 = vmatprep.subr.bf16.mxu0 0
    %430 = vmatpush1.bf16.msra.mxu0 %v412
    %431 = vmatprep.subr.bf16.mxu0 0
    %432 = vmatpush1.bf16.msra.mxu0 %v413
    %433 = vmatprep.subr.bf16.mxu0 0
    %434 = vmatpush1.bf16.msra.mxu0 %v414
    %435 = vmatprep.subr.bf16.mxu0 0
    %436 = vmatpush1.bf16.msra.mxu0 %v415
    %437 = vmatprep.subr.bf16.mxu0 0
    %438 = vmatpush1.bf16.msra.mxu0 %v416
    %439 = vmatprep.subr.bf16.mxu0 0
    %440 = vmatpush1.bf16.msra.mxu0 %v417
    %441 = vmatprep.subr.bf16.mxu0 0
    %442 = vmatpush1.bf16.msra.mxu0 %v418
    %443 = vmatprep.subr.bf16.mxu0 0
    %444 = vmatpush1.bf16.msra.mxu0 0
    %445 = vmatprep.subr.bf16.mxu0 0
    %446 = vmatpush1.bf16.msra.mxu0 0
    %447 = vmatprep.subr.bf16.mxu0 0
    %448 = vmatpush1.bf16.msra.mxu0 0
    %449 = vmatprep.subr.bf16.mxu0 0
    %450 = vmatpush1.bf16.msra.mxu0 0
    %451 = vmatprep.subr.bf16.mxu0 0
    %452 = vmatpush1.bf16.msra.mxu0 0
    %453 = vmatprep.subr.bf16.mxu0 0
    %454 = vmatpush1.bf16.msra.mxu0 0
    %455 = vmatprep.subr.bf16.mxu0 0
    %456 = vmatpush1.bf16.msra.mxu0 0
    %457 = vmatprep.subr.bf16.mxu0 0
    %458 = vmatpush1.bf16.msra.mxu0 0
    %459 = vmatprep.mubr.bf16.mxu0 0
    %460 = vmatmul.mubr.bf16.gmra.mrb[0].mxu0 %v361
    %v461 = vpop.f32.mrb[0].mxu0
    %v462 = vadd.f32 0.0, %v461
    %v463 = vpop.f32.mrb[0].mxu0
    %v464 = vpop.f32.mrb[0].mxu0
    %v465 = vadd.f32 0.0, %v464
    %v466 = vpop.f32.mrb[0].mxu0
    %467 = vmatprep.mubr.bf16.mxu0 0
    %468 = vmatmul.mubr.bf16.gmra.mrb[0].mxu0 %v362
    %v469 = vpop.f32.mrb[0].mxu0
    %v470 = vadd.f32 0.0, %v469
    %v471 = vpop.f32.mrb[0].mxu0
    %v472 = vpop.f32.mrb[0].mxu0
    %v473 = vadd.f32 0.0, %v472
    %v474 = vpop.f32.mrb[0].mxu0
    %475 = vdwg.mxu0
    %v476 = vpack.c.bf16 %v465, %v462
    %v477 = vpack.c.bf16 %v473, %v470
    %v478 = vld [vmem:[%s8] sm:$0x1]
    %v480 = vlaneseq
    %v481 = vshrl.u32 %v480, 7
    %v482 = vsub.s32 0, %v481
    %v483 = vrot.slane %v478, %v482
    %v489 = vunpack.c.l.b16 %v133
    %v490 = vunpack.c.l.b16 %v134
    %v491 = vunpack.c.l.b16 %v135
    %v492 = vunpack.c.l.b16 %v136
    %v493 = vpack.c.b16 %v490, %v489
    %v494 = vpack.c.b16 %v492, %v491
    %v496 = vsel %vm171, %v493, 0
    %v499 = vsel %vm171, %v494, 0
    %501 = vmatprep.subr.bf16.mxu0 0
    %502 = vmatpush1.bf16.msra.mxu0 %v476
    %503 = vmatprep.subr.bf16.mxu0 0
    %504 = vmatpush1.bf16.msra.mxu0 %v477
    %505 = vmatprep.subr.bf16.mxu0 0
    %506 = vmatpush1.bf16.msra.mxu0 0
    %507 = vmatprep.subr.bf16.mxu0 0
    %508 = vmatpush1.bf16.msra.mxu0 0
    %509 = vmatprep.subr.bf16.mxu0 0
    %510 = vmatpush1.bf16.msra.mxu0 0
    %511 = vmatprep.subr.bf16.mxu0 0
    %512 = vmatpush1.bf16.msra.mxu0 0
    %513 = vmatprep.subr.bf16.mxu0 0
    %514 = vmatpush1.bf16.msra.mxu0 0
    %515 = vmatprep.subr.bf16.mxu0 0
    %516 = vmatpush1.bf16.msra.mxu0 0
    %517 = vmatprep.subr.bf16.mxu0 0
    %518 = vmatpush1.bf16.msra.mxu0 0
    %519 = vmatprep.subr.bf16.mxu0 0
    %520 = vmatpush1.bf16.msra.mxu0 0
    %521 = vmatprep.subr.bf16.mxu0 0
    %522 = vmatpush1.bf16.msra.mxu0 0
    %523 = vmatprep.subr.bf16.mxu0 0
    %524 = vmatpush1.bf16.msra.mxu0 0
    %525 = vmatprep.subr.bf16.mxu0 0
    %526 = vmatpush1.bf16.msra.mxu0 0
    %527 = vmatprep.subr.bf16.mxu0 0
    %528 = vmatpush1.bf16.msra.mxu0 0
    %529 = vmatprep.subr.bf16.mxu0 0
    %530 = vmatpush1.bf16.msra.mxu0 0
    %531 = vmatprep.subr.bf16.mxu0 0
    %532 = vmatpush1.bf16.msra.mxu0 0
    %533 = vmatprep.mubr.bf16.mxu0 0
    %534 = vmatmul.mubr.bf16.gmra.mrb[0].mxu0 %v496
    %v535 = vpop.f32.mrb[0].mxu0
    %v536 = vadd.f32 %v483, %v535
    %v537 = vpop.f32.mrb[0].mxu0
    %v538 = vpop.f32.mrb[0].mxu0
    %v539 = vadd.f32 %v483, %v538
    %v540 = vpop.f32.mrb[0].mxu0
    %541 = vmatprep.mubr.bf16.mxu0 0
    %542 = vmatmul.mubr.bf16.gmra.mrb[0].mxu0 %v499
    %v543 = vpop.f32.mrb[0].mxu0
    %v544 = vadd.f32 %v483, %v543
    %v545 = vpop.f32.mrb[0].mxu0
    %v546 = vpop.f32.mrb[0].mxu0
    %v547 = vadd.f32 %v483, %v546
    %v548 = vpop.f32.mrb[0].mxu0
    %549 = vdwg.mxu0
    %v550 = vlaneseq
    %v551 = vand.u32 %v550, 127
    %vm552 = vcmp.lt.s32.totalorder %v551, 8
    %v553 = vsel %vm552, %v536, -1e+30
    %v554 = vsel %vm552, %v539, -1e+30
    %v555 = vsel %vm552, %v544, -1e+30
    %v556 = vsel %vm552, %v547, -1e+30
    %557 = vmax.xlane.f32.xlu0 %v553
    %v558 = vpop.xlane.xlu0 %557
    %559 = vmax.xlane.f32.xlu0 %v554
    %v560 = vpop.xlane.xlu0 %559
    %561 = vmax.xlane.f32.xlu0 %v555
    %v562 = vpop.xlane.xlu0 %561
    %563 = vmax.xlane.f32.xlu0 %v556
    %v564 = vpop.xlane.xlu0 %563
    %v565 = vsub.f32 %v553, %v558
    %v566 = vsub.f32 %v554, %v560
    %v567 = vsub.f32 %v555, %v562
    %v568 = vsub.f32 %v556, %v564
    %v569 = vmul.f32 %v565, 1.442695
    %v570 = vpow.pop %v569
    %v571 = vmul.f32 %v566, 1.442695
    %v572 = vpow.pop %v571
    %v573 = vmul.f32 %v567, 1.442695
    %v574 = vpow.pop %v573
    %v575 = vmul.f32 %v568, 1.442695
    %v576 = vpow.pop %v575
    %v577 = vsel %vm552, %v570, 0.0
    %v578 = vsel %vm552, %v572, 0.0
    %v579 = vsel %vm552, %v574, 0.0
    %v580 = vsel %vm552, %v576, 0.0
    %581 = vadd.xlane.f32.xlu0 %v577
    %v582 = vpop.xlane.xlu0 %581
    %583 = vadd.xlane.f32.xlu0 %v578
    %v584 = vpop.xlane.xlu0 %583
    %585 = vadd.xlane.f32.xlu0 %v579
    %v586 = vpop.xlane.xlu0 %585
    %587 = vadd.xlane.f32.xlu0 %v580
    %v588 = vpop.xlane.xlu0 %587
    %v589 = vlog2.pop %v582
    %v590 = vmul.f32 %v589, 0.6931472
    %v591 = vlog2.pop %v584
    %v592 = vmul.f32 %v591, 0.6931472
    %v593 = vlog2.pop %v586
    %v594 = vmul.f32 %v593, 0.6931472
    %v595 = vlog2.pop %v588
    %v596 = vmul.f32 %v595, 0.6931472
    %v597 = vadd.f32 %v590, %v558
    %v598 = vadd.f32 %v592, %v560
    %v599 = vadd.f32 %v594, %v562
    %v600 = vadd.f32 %v596, %v564
    %v601 = vsub.f32 %v536, %v597
    %v602 = vsub.f32 %v539, %v598
    %v603 = vsub.f32 %v544, %v599
    %v604 = vsub.f32 %v547, %v600
    %v605 = vsel %vm552, %v601, 0.0
    %v606 = vsel %vm552, %v602, 0.0
    %v607 = vsel %vm552, %v603, 0.0
    %v608 = vsel %vm552, %v604, 0.0
    %609 = vst [vmem:[#allocation14] sm:$0xff] %v605
    %610 = vst [vmem:[#allocation14 + $0x8] sm:$0xff] %v606
    %611 = vst [vmem:[#allocation14 + $0x10] sm:$0xff] %v607
    %612 = vst [vmem:[#allocation14 + $0x18] sm:$0xff] %v608
    // Predicated region
    $region66: #{tpu_custom_call.1} parent=1 // pred_check
      _
    $region67: #{tpu_custom_call.1} parent=1 // pred_check_branch
      %614 = sbr.rel (0) target = $region69
    $region68: #{tpu_custom_call.1} parent=1 // pred_region
      %s616 = ssub.s32 512, 512
      %617 = vsyncadd [#allocation4], %s616
      %s618 = sshll.u32 [#allocation14], 4
      %s619 = int_to_ptr.vmem [resolvable:$true] %s618
      %624 = dma.vmem_to_hbm [thread:$0]  %s619, 512, %s9, [#allocation4], 128, 128, 8
    $region69: #{tpu_custom_call.1} parent=1 // pred_fallthru
      _
    // Predicated region
    $region70: #{tpu_custom_call.1} parent=1 // pred_check
      _
    $region71: #{tpu_custom_call.1} parent=1 // pred_check_branch
      %626 = sbr.rel (0) target = $region73
    $region72: #{tpu_custom_call.1} parent=1 // pred_region
      %627 = dma.done [#allocation4], 512
    $region73: #{tpu_custom_call.1} parent=1 // pred_fallthru
      _
    %628 = vsyncpa [#allocation3], 1
    %629 = vsyncpa [#allocation6], 1
    %630 = vsyncpa [#allocation9], 1
    %631 = vsyncpa [#allocation12], 1
    %632 = vsyncpa [#allocation4], 1

</llo_original>
